<compile_context>
chip_gen: v6e
topology: v6e:2x2x1
jax: 0.10.0
libtpu: 0.0.40
codegen_flags: <defaults>
</compile_context>

<pallas_src>
import jax
import jax.numpy as jnp
from jax.experimental import pallas as pl
from jax.experimental.pallas import tpu as pltpu

NEG_SLOPE = 0.01  # default negative_slope of nn.LeakyReLU()

# Conservative budget (bytes) for the double-buffered streamed W1 tile so the
# pipeline fits comfortably inside the default scoped VMEM on all generations
# (v5e 16 MiB, v6e 32 MiB, v7x 32 MiB scoped / 64 MiB physical).
_W1_TILE_BUDGET_BYTES = 8 * 1024 * 1024


def _critic_kernel(x_ref, w1t_ref, w2_ref, o_ref, acc_ref):
    # x_ref:   (TB, H)   activations (resident across the column axis)
    # w1t_ref: (H, TN)   streamed column tile of W1^T
    # w2_ref:  (1, TN)   matching slice of the (1, H) second-layer weight row
    # o_ref:   (TB, 1)   output (resident across the column axis)
    # acc_ref: (TB, 1)   f32 accumulator scratch
    j = pl.program_id(1)

    @pl.when(j == 0)
    def _init():
        acc_ref[...] = jnp.zeros_like(acc_ref)

    # Layer 1 column tile on the MXU, f32 accumulation.
    h = jnp.dot(x_ref[...], w1t_ref[...], preferred_element_type=jnp.float32)
    # LeakyReLU on the VPU (f32).
    h = jnp.where(h > 0, h, NEG_SLOPE * h)
    # Layer 2 (H -> 1): VPU multiply + lane reduction (XLU) instead of an
    # N=1 MXU matmul; accumulate the partial row-dot across column tiles.
    w2_row = w2_ref[...].astype(jnp.float32)                      # (1, TN)
    acc_ref[...] += jnp.sum(h * w2_row, axis=-1, keepdims=True)   # (TB, 1)

    @pl.when(j == pl.num_programs(1) - 1)
    def _finalize():
        o_ref[...] = acc_ref[...].astype(o_ref.dtype)


def _pick_batch_tile(b):
    for tb in (256, 128, 64, 32, 16, 8):
        if b % tb == 0:
            return tb
    return b  # full (small / ragged) batch -> single tile, always legal


def _pick_col_tile(h, itemsize):
    # Largest lane-aligned tile that divides H and whose double-buffered
    # (H, TN) W1 slab stays within the per-generation VMEM budget.
    for tn in (1024, 512, 256, 128):
        if h % tn == 0 and 2 * h * tn * itemsize <= _W1_TILE_BUDGET_BYTES:
            return tn
    return h  # fall back to a single full-width tile


def critic_forward(x, w1t, w2, *, tb=None, tn=None):
    """Fused Critic forward.

    x:   (B, H) activations.
    w1t: (H, H) == linear1.weight.T  (pre-transposed ONCE at load time).
    w2:  (1, H) == linear2.weight in its native row layout.
    Returns (B, 1) float32.
    """
    B, H = x.shape
    assert w1t.shape == (H, H), w1t.shape
    assert w2.shape == (1, H), w2.shape

    if tb is None:
        tb = _pick_batch_tile(B)
    if tn is None:
        tn = _pick_col_tile(H, jnp.dtype(w1t.dtype).itemsize)

    grid = (pl.cdiv(B, tb), pl.cdiv(H, tn))

    return pl.pallas_call(
        _critic_kernel,
        out_shape=jax.ShapeDtypeStruct((B, 1), jnp.float32),
        grid_spec=pltpu.PrefetchScalarGridSpec(
            num_scalar_prefetch=0,
            grid=grid,
            in_specs=[
                pl.BlockSpec((tb, H), lambda i, j: (i, 0)),   # x (resident over j)
                pl.BlockSpec((H, tn), lambda i, j: (0, j)),   # W1^T column tile
                pl.BlockSpec((1, tn), lambda i, j: (0, j)),   # w2 row slice
            ],
            out_specs=pl.BlockSpec((tb, 1), lambda i, j: (i, 0)),
            scratch_shapes=[pltpu.VMEM((tb, 1), jnp.float32)],
        ),
        compiler_params=pltpu.CompilerParams(
            dimension_semantics=("parallel", "arbitrary")),
    )(x, w1t, w2)


def _reference(x, w1, w2):
    h = x @ w1.T
    h = jnp.where(h > 0, h, NEG_SLOPE * h)
    return h @ w2.T


if __name__ == "__main__":
    # Shapes consistent with the module's default: hidden_size=512, small batch.
    B, H = 8, 512
    key = jax.random.PRNGKey(0)
    kx, k1, k2 = jax.random.split(key, 3)

    x = jax.random.normal(kx, (B, H), dtype=jnp.float32)
    # nn.Linear weight layouts: linear1.weight -> (H, H), linear2.weight -> (1, H)
    bound = 1.0 / (H ** 0.5)
    w1 = jax.random.uniform(k1, (H, H), dtype=jnp.float32, minval=-bound, maxval=bound)
    w2 = jax.random.uniform(k2, (1, H), dtype=jnp.float32, minval=-bound, maxval=bound)

    # Pre-transpose W1 once at "parameter load time" (not in the per-call path).
    w1t = jnp.asarray(w1.T)

    ref = _reference(x, w1, w2)

    # 1) Auto-picked tiles (single column tile at H=512).
    out = jax.block_until_ready(critic_forward(x, w1t, w2))
    assert out.shape == (B, 1), out.shape
    assert jnp.allclose(out, ref, atol=1e-4, rtol=1e-4)

    # 2) Forced smaller column tile -> exercises the multi-tile streaming +
    #    accumulator (grid reduction) path.
    out2 = jax.block_until_ready(critic_forward(x, w1t, w2, tn=128))
    assert out2.shape == (B, 1), out2.shape
    assert jnp.allclose(out2, ref, atol=1e-4, rtol=1e-4)

    print("KERNEL_OK")
</pallas_src>

<mosaic_0001>
module attributes {stable_mosaic.version = 11 : i64} {
  func.func @_critic_kernel(%arg0: i32, %arg1: i32, %arg2: memref<8x512xf32, #tpu.memory_space<vmem>>, %arg3: memref<512x512xf32, #tpu.memory_space<vmem>>, %arg4: memref<1x512xf32, #tpu.memory_space<vmem>>, %arg5: memref<8x1xf32, #tpu.memory_space<vmem>>, %arg6: memref<8x1xf32, #tpu.memory_space<vmem>>) attributes {dimension_semantics = [#tpu.dimension_semantics<parallel>, #tpu.dimension_semantics<arbitrary>], iteration_bounds = array<i64: 1, 1>, scalar_prefetch = 0 : i64, scratch_operands = 1 : i64, tpu.core_type = #tpu.core_type<tc>, window_params = [{transform_indices = @transform_0, window_bounds = array<i64: 8, 512>}, {transform_indices = @transform_1, window_bounds = array<i64: 512, 512>}, {transform_indices = @transform_2, window_bounds = array<i64: 1, 512>}, {transform_indices = @transform_3, window_bounds = array<i64: 8, 1>}]} {
    %c0_i32 = arith.constant 0 : i32
    %0 = arith.cmpi eq, %arg1, %c0_i32 : i32
    %1 = arith.extui %0 : i1 to i32
    %c0_i32_0 = arith.constant 0 : i32
    %2 = arith.cmpi ne, %1, %c0_i32_0 : i32
    scf.if %2 {
      %cst_15 = arith.constant 0.000000e+00 : f32
      %22 = vector.broadcast %cst_15 : f32 to vector<8x1xf32>
      %c0_16 = arith.constant 0 : index
      %c0_17 = arith.constant 0 : index
      %23 = vector.load %arg6[%c0_16, %c0_17] : memref<8x1xf32, #tpu.memory_space<vmem>>, vector<8x1xf32>
      tpu.vector_store %arg6[%c0_16, %c0_17], %22 {strides = array<i32>} : memref<8x1xf32, #tpu.memory_space<vmem>>, vector<8x1xf32>,
    } else {
    }
    %c0 = arith.constant 0 : index
    %c0_1 = arith.constant 0 : index
    %3 = vector.load %arg2[%c0, %c0_1] : memref<8x512xf32, #tpu.memory_space<vmem>>, vector<8x512xf32>
    %c0_2 = arith.constant 0 : index
    %c0_3 = arith.constant 0 : index
    %4 = vector.load %arg3[%c0_2, %c0_3] : memref<512x512xf32, #tpu.memory_space<vmem>>, vector<512x512xf32>
    %cst = arith.constant dense<0.000000e+00> : vector<8x512xf32>
    %5 = tpu.matmul %3, %4, %cst {dimension_numbers = #tpu.dot_dimension_numbers<[1], [0], [0], [1], [0, 0, 1, 1], [], []>} : vector<8x512xf32>, vector<512x512xf32>, vector<8x512xf32> -> vector<8x512xf32>
    %cst_4 = arith.constant 0.000000e+00 : f32
    %6 = vector.broadcast %cst_4 : f32 to vector<8x512xf32>
    %7 = arith.cmpf ogt, %5, %6 : vector<8x512xf32>
    %cst_5 = arith.constant 0.00999999977 : f32
    %8 = vector.broadcast %cst_5 : f32 to vector<8x512xf32>
    %9 = arith.mulf %8, %5 : vector<8x512xf32>
    %10 = arith.select %7, %5, %9 : vector<8x512xi1>, vector<8x512xf32>
    %c0_6 = arith.constant 0 : index
    %c0_7 = arith.constant 0 : index
    %11 = vector.load %arg4[%c0_6, %c0_7] : memref<1x512xf32, #tpu.memory_space<vmem>>, vector<1x512xf32>
    %c0_8 = arith.constant 0 : index
    %c0_9 = arith.constant 0 : index
    %12 = vector.load %arg6[%c0_8, %c0_9] : memref<8x1xf32, #tpu.memory_space<vmem>>, vector<8x1xf32>
    %13 = vector.broadcast %11 : vector<1x512xf32> to vector<8x512xf32>
    %14 = arith.mulf %10, %13 : vector<8x512xf32>
    %cst_10 = arith.constant dense<0.000000e+00> : vector<8xf32>
    %15 = vector.multi_reduction <add>, %14, %cst_10 [1] : vector<8x512xf32> to vector<8xf32>
    %16 = vector.shape_cast %15 : vector<8xf32> to vector<8x1xf32>
    %17 = arith.addf %12, %16 : vector<8x1xf32>
    %c0_11 = arith.constant 0 : index
    %c0_12 = arith.constant 0 : index
    %18 = vector.load %arg6[%c0_11, %c0_12] : memref<8x1xf32, #tpu.memory_space<vmem>>, vector<8x1xf32>
    tpu.vector_store %arg6[%c0_11, %c0_12], %17 {strides = array<i32>} : memref<8x1xf32, #tpu.memory_space<vmem>>, vector<8x1xf32>,
    %c0_i32_13 = arith.constant 0 : i32
    %19 = arith.cmpi eq, %arg1, %c0_i32_13 : i32
    %20 = arith.extui %19 : i1 to i32
    %c0_i32_14 = arith.constant 0 : i32
    %21 = arith.cmpi ne, %20, %c0_i32_14 : i32
    scf.if %21 {
      %c0_15 = arith.constant 0 : index
      %c0_16 = arith.constant 0 : index
      %22 = vector.load %arg6[%c0_15, %c0_16] : memref<8x1xf32, #tpu.memory_space<vmem>>, vector<8x1xf32>
      %c0_17 = arith.constant 0 : index
      %c0_18 = arith.constant 0 : index
      %23 = vector.load %arg5[%c0_17, %c0_18] : memref<8x1xf32, #tpu.memory_space<vmem>>, vector<8x1xf32>
      tpu.vector_store %arg5[%c0_17, %c0_18], %22 {strides = array<i32>} : memref<8x1xf32, #tpu.memory_space<vmem>>, vector<8x1xf32>,
    } else {
    }
    return
  }
  func.func @transform_0(%arg0: i32, %arg1: i32) -> (i32, i32) {
    %c0_i32 = arith.constant 0 : i32
    %c0_i32_0 = arith.constant 0 : i32
    return %arg0, %c0_i32 : i32, i32
  }
  func.func @transform_1(%arg0: i32, %arg1: i32) -> (i32, i32) {
    %c0_i32 = arith.constant 0 : i32
    %c0_i32_0 = arith.constant 0 : i32
    return %c0_i32, %arg1 : i32, i32
  }
  func.func @transform_2(%arg0: i32, %arg1: i32) -> (i32, i32) {
    %c0_i32 = arith.constant 0 : i32
    %c0_i32_0 = arith.constant 0 : i32
    return %c0_i32, %arg1 : i32, i32
  }
  func.func @transform_3(%arg0: i32, %arg1: i32) -> (i32, i32) {
    %c0_i32 = arith.constant 0 : i32
    %c0_i32_0 = arith.constant 0 : i32
    return %arg0, %c0_i32 : i32, i32
  }
}

</mosaic_0001>

<llo_original>
// kernel: tpu_custom_call.1
$region0: #{tpu_custom_call.1}
  #allocation0 [shape = 'u32[]', space=smem, size = 0x4, offset = 0x4, fixed_abs, tag = 'smem constant byte address 0x4 - core index']
  #allocation1 [shape = 'u32[144,128]{1,0:T(1,128)}', space=vmem, size = 0x12000, scoped, tag = 'internal scratch']
  #allocation2 [shape = 'f32[8,1]{1,0:T(8,128)}', space=vmem, size = 0x1000, scoped, tag = 'scratch operand']
  %s0 = inlined_call_operand.hbm [shape: f32[8,512], index: 0, kind: input, shape index: {}]
  %s1 = inlined_call_operand.hbm [shape: f32[512,512], index: 1, kind: input, shape index: {}]
  %s2 = inlined_call_operand.hbm [shape: f32[1,512], index: 2, kind: input, shape index: {}]
  %s3 = inlined_call_operand.vmem [shape: f32[8,1], index: 3, kind: output, shape index: {}]
  %s4 = sld [smem:[#allocation0]]
  $region42: #{tpu_custom_call.1} parent=0
    _
  %s6 = ssub.s32 1, %s4
  %s7 = scalar_select 0, %s6, %s4
  $region1: #{tpu_custom_call.1} parent=0
    #allocation3 [shape = 'u8[16384]{0}', space=vmem, size = 0x4000, scoped, tag = 'input window, operand 0, single buffered']
    #allocation4 [shape = 's32[1]{0}', space=sflag, size = 0x4, scoped, tag = 'scoped memory for tpu_custom_call.1']
    #allocation5 [shape = 'u8[1048576]{0}', space=vmem, size = 0x100000, scoped, tag = 'input window, operand 1, single buffered']
    #allocation6 [shape = 's32[1]{0}', space=sflag, size = 0x4, scoped, tag = 'scoped memory for tpu_custom_call.1']
    #allocation7 [shape = 'u8[2048]{0}', space=vmem, size = 0x800, scoped, tag = 'input window, operand 2, single buffered']
    %8 = vsyncpa [#allocation4], 0
    %9 = vsyncpa [#allocation6], 0
    // Predicated region
    $region2: #{tpu_custom_call.1} parent=1 // pred_check
      _
    $region3: #{tpu_custom_call.1} parent=1 // pred_check_branch
      %11 = sbr.rel (0) target = $region5
    $region4: #{tpu_custom_call.1} parent=1 // pred_region
      %s13 = ssub.s32 512, 512
      %14 = vsyncadd [#allocation4], %s13
      %s16 = sshll.u32 [#allocation3], 4
      %s17 = int_to_ptr.vmem [resolvable:$true] %s16
      %19 = dma.hbm_to_vmem [thread:$0]  %s0, 512, %s17, [#allocation4]
    $region5: #{tpu_custom_call.1} parent=1 // pred_fallthru
      _
    // Predicated region
    $region6: #{tpu_custom_call.1} parent=1 // pred_check
      _
    $region7: #{tpu_custom_call.1} parent=1 // pred_check_branch
      %21 = sbr.rel (0) target = $region9
    $region8: #{tpu_custom_call.1} parent=1 // pred_region
      %s23 = ssub.s32 32768, 32768
      %24 = vsyncadd [#allocation6], %s23
      %s25 = sshll.u32 [#allocation5], 4
      %s26 = int_to_ptr.vmem [resolvable:$true] %s25
      %31 = dma.hbm_to_vmem [thread:$0]  %s1, 32768, %s26, [#allocation6], 512, 512, 32
    $region9: #{tpu_custom_call.1} parent=1 // pred_fallthru
      _
    // Predicated region
    $region10: #{tpu_custom_call.1} parent=1 // pred_check
      _
    $region11: #{tpu_custom_call.1} parent=1 // pred_check_branch
      %33 = sbr.rel (0) target = $region13
    $region12: #{tpu_custom_call.1} parent=1 // pred_region
      %s35 = ssub.s32 64, 64
      %36 = vsyncadd [#allocation6], %s35
      %s38 = sshll.u32 [#allocation7], 4
      %s39 = int_to_ptr.vmem [resolvable:$true] %s38
      %41 = dma.hbm_to_vmem [thread:$0]  %s2, 64, %s39, [#allocation6]
    $region13: #{tpu_custom_call.1} parent=1 // pred_fallthru
      _
    // Predicated region
    $region14: #{tpu_custom_call.1} parent=1 // pred_check
      _
    $region15: #{tpu_custom_call.1} parent=1 // pred_check_branch
      %43 = sbr.rel (0) target = $region17
    $region16: #{tpu_custom_call.1} parent=1 // pred_region
      %44 = dma.done [#allocation4], 512
    $region17: #{tpu_custom_call.1} parent=1 // pred_fallthru
      _
    // Predicated region
    $region18: #{tpu_custom_call.1} parent=1 // pred_check
      _
    $region19: #{tpu_custom_call.1} parent=1 // pred_check_branch
      %46 = sbr.rel (0) target = $region21
    $region20: #{tpu_custom_call.1} parent=1 // pred_region
      %47 = dma.done [#allocation6], 32768
    $region21: #{tpu_custom_call.1} parent=1 // pred_fallthru
      _
    // Predicated region
    $region22: #{tpu_custom_call.1} parent=1 // pred_check
      _
    $region23: #{tpu_custom_call.1} parent=1 // pred_check_branch
      %49 = sbr.rel (0) target = $region25
    $region24: #{tpu_custom_call.1} parent=1 // pred_region
      %50 = dma.done [#allocation6], 64
    $region25: #{tpu_custom_call.1} parent=1 // pred_fallthru
      _
    %p51 = scmp.eq.s32.totalorder 0, 0
    // Predicated region
    $region26: #{tpu_custom_call.1} parent=1 // pred_check
      %p52 = pneg %p51
    $region27: #{tpu_custom_call.1} parent=1 // pred_check_branch
      %54 = sbr.rel (%p52) target = $region29
    $region28: #{tpu_custom_call.1} parent=1 // pred_region
      %vm55 = vcmask 7168
      %56 = vst.msk [vmem:[#allocation2] sm:$0xff] %vm55, 0.0
    $region29: #{tpu_custom_call.1} parent=1 // pred_fallthru
      _
    %v57 = vld [vmem:[#allocation3] sm:$0xff]
    %v58 = vld [vmem:[#allocation3 + $0x8] sm:$0xff]
    %v59 = vld [vmem:[#allocation3 + $0x10] sm:$0xff]
    %v60 = vld [vmem:[#allocation3 + $0x18] sm:$0xff]
    %v61 = vld [vmem:[#allocation5] sm:$0xff]
    %v62 = vld [vmem:[#allocation5 + $0x8] sm:$0xff]
    %v63 = vld [vmem:[#allocation5 + $0x10] sm:$0xff]
    %v64 = vld [vmem:[#allocation5 + $0x18] sm:$0xff]
    %v65 = vld [vmem:[#allocation5 + $0x20] sm:$0xff]
    %v66 = vld [vmem:[#allocation5 + $0x28] sm:$0xff]
    %v67 = vld [vmem:[#allocation5 + $0x30] sm:$0xff]
    %v68 = vld [vmem:[#allocation5 + $0x38] sm:$0xff]
    %v69 = vld [vmem:[#allocation5 + $0x40] sm:$0xff]
    %v70 = vld [vmem:[#allocation5 + $0x48] sm:$0xff]
    %v71 = vld [vmem:[#allocation5 + $0x50] sm:$0xff]
    %v72 = vld [vmem:[#allocation5 + $0x58] sm:$0xff]
    %v73 = vld [vmem:[#allocation5 + $0x60] sm:$0xff]
    %v74 = vld [vmem:[#allocation5 + $0x68] sm:$0xff]
    %v75 = vld [vmem:[#allocation5 + $0x70] sm:$0xff]
    %v76 = vld [vmem:[#allocation5 + $0x78] sm:$0xff]
    %v77 = vld [vmem:[#allocation5 + $0x80] sm:$0xff]
    %v78 = vld [vmem:[#allocation5 + $0x88] sm:$0xff]
    %v79 = vld [vmem:[#allocation5 + $0x90] sm:$0xff]
    %v80 = vld [vmem:[#allocation5 + $0x98] sm:$0xff]
    %v81 = vld [vmem:[#allocation5 + $0xa0] sm:$0xff]
    %v82 = vld [vmem:[#allocation5 + $0xa8] sm:$0xff]
    %v83 = vld [vmem:[#allocation5 + $0xb0] sm:$0xff]
    %v84 = vld [vmem:[#allocation5 + $0xb8] sm:$0xff]
    %v85 = vld [vmem:[#allocation5 + $0xc0] sm:$0xff]
    %v86 = vld [vmem:[#allocation5 + $0xc8] sm:$0xff]
    %v87 = vld [vmem:[#allocation5 + $0xd0] sm:$0xff]
    %v88 = vld [vmem:[#allocation5 + $0xd8] sm:$0xff]
    %v89 = vld [vmem:[#allocation5 + $0xe0] sm:$0xff]
    %v90 = vld [vmem:[#allocation5 + $0xe8] sm:$0xff]
    %v91 = vld [vmem:[#allocation5 + $0xf0] sm:$0xff]
    %v92 = vld [vmem:[#allocation5 + $0xf8] sm:$0xff]
    %v93 = vld [vmem:[#allocation5 + $0x100] sm:$0xff]
    %v94 = vld [vmem:[#allocation5 + $0x108] sm:$0xff]
    %v95 = vld [vmem:[#allocation5 + $0x110] sm:$0xff]
    %v96 = vld [vmem:[#allocation5 + $0x118] sm:$0xff]
    %v97 = vld [vmem:[#allocation5 + $0x120] sm:$0xff]
    %v98 = vld [vmem:[#allocation5 + $0x128] sm:$0xff]
    %v99 = vld [vmem:[#allocation5 + $0x130] sm:$0xff]
    %v100 = vld [vmem:[#allocation5 + $0x138] sm:$0xff]
    %v101 = vld [vmem:[#allocation5 + $0x140] sm:$0xff]
    %v102 = vld [vmem:[#allocation5 + $0x148] sm:$0xff]
    %v103 = vld [vmem:[#allocation5 + $0x150] sm:$0xff]
    %v104 = vld [vmem:[#allocation5 + $0x158] sm:$0xff]
    %v105 = vld [vmem:[#allocation5 + $0x160] sm:$0xff]
    %v106 = vld [vmem:[#allocation5 + $0x168] sm:$0xff]
    %v107 = vld [vmem:[#allocation5 + $0x170] sm:$0xff]
    %v108 = vld [vmem:[#allocation5 + $0x178] sm:$0xff]
    %v109 = vld [vmem:[#allocation5 + $0x180] sm:$0xff]
    %v110 = vld [vmem:[#allocation5 + $0x188] sm:$0xff]
    %v111 = vld [vmem:[#allocation5 + $0x190] sm:$0xff]
    %v112 = vld [vmem:[#allocation5 + $0x198] sm:$0xff]
    %v113 = vld [vmem:[#allocation5 + $0x1a0] sm:$0xff]
    %v114 = vld [vmem:[#allocation5 + $0x1a8] sm:$0xff]
    %v115 = vld [vmem:[#allocation5 + $0x1b0] sm:$0xff]
    %v116 = vld [vmem:[#allocation5 + $0x1b8] sm:$0xff]
    %v117 = vld [vmem:[#allocation5 + $0x1c0] sm:$0xff]
    %v118 = vld [vmem:[#allocation5 + $0x1c8] sm:$0xff]
    %v119 = vld [vmem:[#allocation5 + $0x1d0] sm:$0xff]
    %v120 = vld [vmem:[#allocation5 + $0x1d8] sm:$0xff]
    %v121 = vld [vmem:[#allocation5 + $0x1e0] sm:$0xff]
    %v122 = vld [vmem:[#allocation5 + $0x1e8] sm:$0xff]
    %v123 = vld [vmem:[#allocation5 + $0x1f0] sm:$0xff]
    %v124 = vld [vmem:[#allocation5 + $0x1f8] sm:$0xff]
    %v125 = vld [vmem:[#allocation5 + $0x200] sm:$0xff]
    %v126 = vld [vmem:[#allocation5 + $0x208] sm:$0xff]
    %v127 = vld [vmem:[#allocation5 + $0x210] sm:$0xff]
    %v128 = vld [vmem:[#allocation5 + $0x218] sm:$0xff]
    %v129 = vld [vmem:[#allocation5 + $0x220] sm:$0xff]
    %v130 = vld [vmem:[#allocation5 + $0x228] sm:$0xff]
    %v131 = vld [vmem:[#allocation5 + $0x230] sm:$0xff]
    %v132 = vld [vmem:[#allocation5 + $0x238] sm:$0xff]
    %v133 = vld [vmem:[#allocation5 + $0x240] sm:$0xff]
    %v134 = vld [vmem:[#allocation5 + $0x248] sm:$0xff]
    %v135 = vld [vmem:[#allocation5 + $0x250] sm:$0xff]
    %v136 = vld [vmem:[#allocation5 + $0x258] sm:$0xff]
    %v137 = vld [vmem:[#allocation5 + $0x260] sm:$0xff]
    %v138 = vld [vmem:[#allocation5 + $0x268] sm:$0xff]
    %v139 = vld [vmem:[#allocation5 + $0x270] sm:$0xff]
    %v140 = vld [vmem:[#allocation5 + $0x278] sm:$0xff]
    %v141 = vld [vmem:[#allocation5 + $0x280] sm:$0xff]
    %v142 = vld [vmem:[#allocation5 + $0x288] sm:$0xff]
    %v143 = vld [vmem:[#allocation5 + $0x290] sm:$0xff]
    %v144 = vld [vmem:[#allocation5 + $0x298] sm:$0xff]
    %v145 = vld [vmem:[#allocation5 + $0x2a0] sm:$0xff]
    %v146 = vld [vmem:[#allocation5 + $0x2a8] sm:$0xff]
    %v147 = vld [vmem:[#allocation5 + $0x2b0] sm:$0xff]
    %v148 = vld [vmem:[#allocation5 + $0x2b8] sm:$0xff]
    %v149 = vld [vmem:[#allocation5 + $0x2c0] sm:$0xff]
    %v150 = vld [vmem:[#allocation5 + $0x2c8] sm:$0xff]
    %v151 = vld [vmem:[#allocation5 + $0x2d0] sm:$0xff]
    %v152 = vld [vmem:[#allocation5 + $0x2d8] sm:$0xff]
    %v153 = vld [vmem:[#allocation5 + $0x2e0] sm:$0xff]
    %v154 = vld [vmem:[#allocation5 + $0x2e8] sm:$0xff]
    %v155 = vld [vmem:[#allocation5 + $0x2f0] sm:$0xff]
    %v156 = vld [vmem:[#allocation5 + $0x2f8] sm:$0xff]
    %v157 = vld [vmem:[#allocation5 + $0x300] sm:$0xff]
    %v158 = vld [vmem:[#allocation5 + $0x308] sm:$0xff]
    %v159 = vld [vmem:[#allocation5 + $0x310] sm:$0xff]
    %v160 = vld [vmem:[#allocation5 + $0x318] sm:$0xff]
    %v161 = vld [vmem:[#allocation5 + $0x320] sm:$0xff]
    %v162 = vld [vmem:[#allocation5 + $0x328] sm:$0xff]
    %v163 = vld [vmem:[#allocation5 + $0x330] sm:$0xff]
    %v164 = vld [vmem:[#allocation5 + $0x338] sm:$0xff]
    %v165 = vld [vmem:[#allocation5 + $0x340] sm:$0xff]
    %v166 = vld [vmem:[#allocation5 + $0x348] sm:$0xff]
    %v167 = vld [vmem:[#allocation5 + $0x350] sm:$0xff]
    %v168 = vld [vmem:[#allocation5 + $0x358] sm:$0xff]
    %v169 = vld [vmem:[#allocation5 + $0x360] sm:$0xff]
    %v170 = vld [vmem:[#allocation5 + $0x368] sm:$0xff]
    %v171 = vld [vmem:[#allocation5 + $0x370] sm:$0xff]
    %v172 = vld [vmem:[#allocation5 + $0x378] sm:$0xff]
    %v173 = vld [vmem:[#allocation5 + $0x380] sm:$0xff]
    %v174 = vld [vmem:[#allocation5 + $0x388] sm:$0xff]
    %v175 = vld [vmem:[#allocation5 + $0x390] sm:$0xff]
    %v176 = vld [vmem:[#allocation5 + $0x398] sm:$0xff]
    %v177 = vld [vmem:[#allocation5 + $0x3a0] sm:$0xff]
    %v178 = vld [vmem:[#allocation5 + $0x3a8] sm:$0xff]
    %v179 = vld [vmem:[#allocation5 + $0x3b0] sm:$0xff]
    %v180 = vld [vmem:[#allocation5 + $0x3b8] sm:$0xff]
    %v181 = vld [vmem:[#allocation5 + $0x3c0] sm:$0xff]
    %v182 = vld [vmem:[#allocation5 + $0x3c8] sm:$0xff]
    %v183 = vld [vmem:[#allocation5 + $0x3d0] sm:$0xff]
    %v184 = vld [vmem:[#allocation5 + $0x3d8] sm:$0xff]
    %v185 = vld [vmem:[#allocation5 + $0x3e0] sm:$0xff]
    %v186 = vld [vmem:[#allocation5 + $0x3e8] sm:$0xff]
    %v187 = vld [vmem:[#allocation5 + $0x3f0] sm:$0xff]
    %v188 = vld [vmem:[#allocation5 + $0x3f8] sm:$0xff]
    %v189 = vld [vmem:[#allocation5 + $0x400] sm:$0xff]
    %v190 = vld [vmem:[#allocation5 + $0x408] sm:$0xff]
    %v191 = vld [vmem:[#allocation5 + $0x410] sm:$0xff]
    %v192 = vld [vmem:[#allocation5 + $0x418] sm:$0xff]
    %v193 = vld [vmem:[#allocation5 + $0x420] sm:$0xff]
    %v194 = vld [vmem:[#allocation5 + $0x428] sm:$0xff]
    %v195 = vld [vmem:[#allocation5 + $0x430] sm:$0xff]
    %v196 = vld [vmem:[#allocation5 + $0x438] sm:$0xff]
    %v197 = vld [vmem:[#allocation5 + $0x440] sm:$0xff]
    %v198 = vld [vmem:[#allocation5 + $0x448] sm:$0xff]
    %v199 = vld [vmem:[#allocation5 + $0x450] sm:$0xff]
    %v200 = vld [vmem:[#allocation5 + $0x458] sm:$0xff]
    %v201 = vld [vmem:[#allocation5 + $0x460] sm:$0xff]
    %v202 = vld [vmem:[#allocation5 + $0x468] sm:$0xff]
    %v203 = vld [vmem:[#allocation5 + $0x470] sm:$0xff]
    %v204 = vld [vmem:[#allocation5 + $0x478] sm:$0xff]
    %v205 = vld [vmem:[#allocation5 + $0x480] sm:$0xff]
    %v206 = vld [vmem:[#allocation5 + $0x488] sm:$0xff]
    %v207 = vld [vmem:[#allocation5 + $0x490] sm:$0xff]
    %v208 = vld [vmem:[#allocation5 + $0x498] sm:$0xff]
    %v209 = vld [vmem:[#allocation5 + $0x4a0] sm:$0xff]
    %v210 = vld [vmem:[#allocation5 + $0x4a8] sm:$0xff]
    %v211 = vld [vmem:[#allocation5 + $0x4b0] sm:$0xff]
    %v212 = vld [vmem:[#allocation5 + $0x4b8] sm:$0xff]
    %v213 = vld [vmem:[#allocation5 + $0x4c0] sm:$0xff]
    %v214 = vld [vmem:[#allocation5 + $0x4c8] sm:$0xff]
    %v215 = vld [vmem:[#allocation5 + $0x4d0] sm:$0xff]
    %v216 = vld [vmem:[#allocation5 + $0x4d8] sm:$0xff]
    %v217 = vld [vmem:[#allocation5 + $0x4e0] sm:$0xff]
    %v218 = vld [vmem:[#allocation5 + $0x4e8] sm:$0xff]
    %v219 = vld [vmem:[#allocation5 + $0x4f0] sm:$0xff]
    %v220 = vld [vmem:[#allocation5 + $0x4f8] sm:$0xff]
    %v221 = vld [vmem:[#allocation5 + $0x500] sm:$0xff]
    %v222 = vld [vmem:[#allocation5 + $0x508] sm:$0xff]
    %v223 = vld [vmem:[#allocation5 + $0x510] sm:$0xff]
    %v224 = vld [vmem:[#allocation5 + $0x518] sm:$0xff]
    %v225 = vld [vmem:[#allocation5 + $0x520] sm:$0xff]
    %v226 = vld [vmem:[#allocation5 + $0x528] sm:$0xff]
    %v227 = vld [vmem:[#allocation5 + $0x530] sm:$0xff]
    %v228 = vld [vmem:[#allocation5 + $0x538] sm:$0xff]
    %v229 = vld [vmem:[#allocation5 + $0x540] sm:$0xff]
    %v230 = vld [vmem:[#allocation5 + $0x548] sm:$0xff]
    %v231 = vld [vmem:[#allocation5 + $0x550] sm:$0xff]
    %v232 = vld [vmem:[#allocation5 + $0x558] sm:$0xff]
    %v233 = vld [vmem:[#allocation5 + $0x560] sm:$0xff]
    %v234 = vld [vmem:[#allocation5 + $0x568] sm:$0xff]
    %v235 = vld [vmem:[#allocation5 + $0x570] sm:$0xff]
    %v236 = vld [vmem:[#allocation5 + $0x578] sm:$0xff]
    %v237 = vld [vmem:[#allocation5 + $0x580] sm:$0xff]
    %v238 = vld [vmem:[#allocation5 + $0x588] sm:$0xff]
    %v239 = vld [vmem:[#allocation5 + $0x590] sm:$0xff]
    %v240 = vld [vmem:[#allocation5 + $0x598] sm:$0xff]
    %v241 = vld [vmem:[#allocation5 + $0x5a0] sm:$0xff]
    %v242 = vld [vmem:[#allocation5 + $0x5a8] sm:$0xff]
    %v243 = vld [vmem:[#allocation5 + $0x5b0] sm:$0xff]
    %v244 = vld [vmem:[#allocation5 + $0x5b8] sm:$0xff]
    %v245 = vld [vmem:[#allocation5 + $0x5c0] sm:$0xff]
    %v246 = vld [vmem:[#allocation5 + $0x5c8] sm:$0xff]
    %v247 = vld [vmem:[#allocation5 + $0x5d0] sm:$0xff]
    %v248 = vld [vmem:[#allocation5 + $0x5d8] sm:$0xff]
    %v249 = vld [vmem:[#allocation5 + $0x5e0] sm:$0xff]
    %v250 = vld [vmem:[#allocation5 + $0x5e8] sm:$0xff]
    %v251 = vld [vmem:[#allocation5 + $0x5f0] sm:$0xff]
    %v252 = vld [vmem:[#allocation5 + $0x5f8] sm:$0xff]
    %v253 = vld [vmem:[#allocation5 + $0x600] sm:$0xff]
    %v254 = vld [vmem:[#allocation5 + $0x608] sm:$0xff]
    %v255 = vld [vmem:[#allocation5 + $0x610] sm:$0xff]
    %v256 = vld [vmem:[#allocation5 + $0x618] sm:$0xff]
    %v257 = vld [vmem:[#allocation5 + $0x620] sm:$0xff]
    %v258 = vld [vmem:[#allocation5 + $0x628] sm:$0xff]
    %v259 = vld [vmem:[#allocation5 + $0x630] sm:$0xff]
    %v260 = vld [vmem:[#allocation5 + $0x638] sm:$0xff]
    %v261 = vld [vmem:[#allocation5 + $0x640] sm:$0xff]
    %v262 = vld [vmem:[#allocation5 + $0x648] sm:$0xff]
    %v263 = vld [vmem:[#allocation5 + $0x650] sm:$0xff]
    %v264 = vld [vmem:[#allocation5 + $0x658] sm:$0xff]
    %v265 = vld [vmem:[#allocation5 + $0x660] sm:$0xff]
    %v266 = vld [vmem:[#allocation5 + $0x668] sm:$0xff]
    %v267 = vld [vmem:[#allocation5 + $0x670] sm:$0xff]
    %v268 = vld [vmem:[#allocation5 + $0x678] sm:$0xff]
    %v269 = vld [vmem:[#allocation5 + $0x680] sm:$0xff]
    %v270 = vld [vmem:[#allocation5 + $0x688] sm:$0xff]
    %v271 = vld [vmem:[#allocation5 + $0x690] sm:$0xff]
    %v272 = vld [vmem:[#allocation5 + $0x698] sm:$0xff]
    %v273 = vld [vmem:[#allocation5 + $0x6a0] sm:$0xff]
    %v274 = vld [vmem:[#allocation5 + $0x6a8] sm:$0xff]
    %v275 = vld [vmem:[#allocation5 + $0x6b0] sm:$0xff]
    %v276 = vld [vmem:[#allocation5 + $0x6b8] sm:$0xff]
    %v277 = vld [vmem:[#allocation5 + $0x6c0] sm:$0xff]
    %v278 = vld [vmem:[#allocation5 + $0x6c8] sm:$0xff]
    %v279 = vld [vmem:[#allocation5 + $0x6d0] sm:$0xff]
    %v280 = vld [vmem:[#allocation5 + $0x6d8] sm:$0xff]
    %v281 = vld [vmem:[#allocation5 + $0x6e0] sm:$0xff]
    %v282 = vld [vmem:[#allocation5 + $0x6e8] sm:$0xff]
    %v283 = vld [vmem:[#allocation5 + $0x6f0] sm:$0xff]
    %v284 = vld [vmem:[#allocation5 + $0x6f8] sm:$0xff]
    %v285 = vld [vmem:[#allocation5 + $0x700] sm:$0xff]
    %v286 = vld [vmem:[#allocation5 + $0x708] sm:$0xff]
    %v287 = vld [vmem:[#allocation5 + $0x710] sm:$0xff]
    %v288 = vld [vmem:[#allocation5 + $0x718] sm:$0xff]
    %v289 = vld [vmem:[#allocation5 + $0x720] sm:$0xff]
    %v290 = vld [vmem:[#allocation5 + $0x728] sm:$0xff]
    %v291 = vld [vmem:[#allocation5 + $0x730] sm:$0xff]
    %v292 = vld [vmem:[#allocation5 + $0x738] sm:$0xff]
    %v293 = vld [vmem:[#allocation5 + $0x740] sm:$0xff]
    %v294 = vld [vmem:[#allocation5 + $0x748] sm:$0xff]
    %v295 = vld [vmem:[#allocation5 + $0x750] sm:$0xff]
    %v296 = vld [vmem:[#allocation5 + $0x758] sm:$0xff]
    %v297 = vld [vmem:[#allocation5 + $0x760] sm:$0xff]
    %v298 = vld [vmem:[#allocation5 + $0x768] sm:$0xff]
    %v299 = vld [vmem:[#allocation5 + $0x770] sm:$0xff]
    %v300 = vld [vmem:[#allocation5 + $0x778] sm:$0xff]
    %v301 = vld [vmem:[#allocation5 + $0x780] sm:$0xff]
    %v302 = vld [vmem:[#allocation5 + $0x788] sm:$0xff]
    %v303 = vld [vmem:[#allocation5 + $0x790] sm:$0xff]
    %v304 = vld [vmem:[#allocation5 + $0x798] sm:$0xff]
    %v305 = vld [vmem:[#allocation5 + $0x7a0] sm:$0xff]
    %v306 = vld [vmem:[#allocation5 + $0x7a8] sm:$0xff]
    %v307 = vld [vmem:[#allocation5 + $0x7b0] sm:$0xff]
    %v308 = vld [vmem:[#allocation5 + $0x7b8] sm:$0xff]
    %v309 = vld [vmem:[#allocation5 + $0x7c0] sm:$0xff]
    %v310 = vld [vmem:[#allocation5 + $0x7c8] sm:$0xff]
    %v311 = vld [vmem:[#allocation5 + $0x7d0] sm:$0xff]
    %v312 = vld [vmem:[#allocation5 + $0x7d8] sm:$0xff]
    %v313 = vld [vmem:[#allocation5 + $0x7e0] sm:$0xff]
    %v314 = vld [vmem:[#allocation5 + $0x7e8] sm:$0xff]
    %v315 = vld [vmem:[#allocation5 + $0x7f0] sm:$0xff]
    %v316 = vld [vmem:[#allocation5 + $0x7f8] sm:$0xff]
    %317 = vmatprep.subr.mxu0 %v122
    %318 = vmatpush1.msra.mxu0 %v121
    %319 = vmatprep.subr.mxu0 %v118
    %320 = vmatpush1.msra.mxu0 %v117
    %321 = vmatprep.subr.mxu0 %v114
    %322 = vmatpush1.msra.mxu0 %v113
    %323 = vmatprep.subr.mxu0 %v110
    %324 = vmatpush1.msra.mxu0 %v109
    %325 = vmatprep.subr.mxu0 %v106
    %326 = vmatpush1.msra.mxu0 %v105
    %327 = vmatprep.subr.mxu0 %v102
    %328 = vmatpush1.msra.mxu0 %v101
    %329 = vmatprep.subr.mxu0 %v98
    %330 = vmatpush1.msra.mxu0 %v97
    %331 = vmatprep.subr.mxu0 %v94
    %332 = vmatpush1.msra.mxu0 %v93
    %333 = vmatprep.subr.mxu0 %v90
    %334 = vmatpush1.msra.mxu0 %v89
    %335 = vmatprep.subr.mxu0 %v86
    %336 = vmatpush1.msra.mxu0 %v85
    %337 = vmatprep.subr.mxu0 %v82
    %338 = vmatpush1.msra.mxu0 %v81
    %339 = vmatprep.subr.mxu0 %v78
    %340 = vmatpush1.msra.mxu0 %v77
    %341 = vmatprep.subr.mxu0 %v74
    %342 = vmatpush1.msra.mxu0 %v73
    %343 = vmatprep.subr.mxu0 %v70
    %344 = vmatpush1.msra.mxu0 %v69
    %345 = vmatprep.subr.mxu0 %v66
    %346 = vmatpush1.msra.mxu0 %v65
    %347 = vmatprep.subr.mxu0 %v62
    %348 = vmatpush1.msra.mxu0 %v61
    %349 = vmatprep.subr.mxu0 %v186
    %350 = vmatpush2.msra.mxu0 %v185
    %351 = vmatprep.subr.mxu0 %v182
    %352 = vmatpush2.msra.mxu0 %v181
    %353 = vmatprep.subr.mxu0 %v178
    %354 = vmatpush2.msra.mxu0 %v177
    %355 = vmatprep.subr.mxu0 %v174
    %356 = vmatpush2.msra.mxu0 %v173
    %357 = vmatprep.subr.mxu0 %v170
    %358 = vmatpush2.msra.mxu0 %v169
    %359 = vmatprep.subr.mxu0 %v166
    %360 = vmatpush2.msra.mxu0 %v165
    %361 = vmatprep.subr.mxu0 %v162
    %362 = vmatpush2.msra.mxu0 %v161
    %363 = vmatprep.subr.mxu0 %v158
    %364 = vmatpush2.msra.mxu0 %v157
    %365 = vmatprep.subr.mxu0 %v154
    %366 = vmatpush2.msra.mxu0 %v153
    %367 = vmatprep.subr.mxu0 %v150
    %368 = vmatpush2.msra.mxu0 %v149
    %369 = vmatprep.subr.mxu0 %v146
    %370 = vmatpush2.msra.mxu0 %v145
    %371 = vmatprep.subr.mxu0 %v142
    %372 = vmatpush2.msra.mxu0 %v141
    %373 = vmatprep.subr.mxu0 %v138
    %374 = vmatpush2.msra.mxu0 %v137
    %375 = vmatprep.subr.mxu0 %v134
    %376 = vmatpush2.msra.mxu0 %v133
    %377 = vmatprep.subr.mxu0 %v130
    %378 = vmatpush2.msra.mxu0 %v129
    %379 = vmatprep.subr.mxu0 %v126
    %380 = vmatpush2.msra.mxu0 %v125
    %381 = vmatprep.mubr.f32.mxu0 %v58
    %382 = vmatmul.mubr.f32.gmra.mxu0 %v57
    %v383 = vpop.f32.mrf.mxu0
    %v384 = vadd.f32 0.0, %v383
    %v385 = vpop.f32.mrf.mxu0
    %v386 = vadd.f32 0.0, %v385
    %387 = vdwg.mxu0
    %388 = vmatprep.subr.mxu0 %v250
    %389 = vmatpush1.msra.mxu0 %v249
    %390 = vmatprep.subr.mxu0 %v246
    %391 = vmatpush1.msra.mxu0 %v245
    %392 = vmatprep.subr.mxu0 %v242
    %393 = vmatpush1.msra.mxu0 %v241
    %394 = vmatprep.subr.mxu0 %v238
    %395 = vmatpush1.msra.mxu0 %v237
    %396 = vmatprep.subr.mxu0 %v234
    %397 = vmatpush1.msra.mxu0 %v233
    %398 = vmatprep.subr.mxu0 %v230
    %399 = vmatpush1.msra.mxu0 %v229
    %400 = vmatprep.subr.mxu0 %v226
    %401 = vmatpush1.msra.mxu0 %v225
    %402 = vmatprep.subr.mxu0 %v222
    %403 = vmatpush1.msra.mxu0 %v221
    %404 = vmatprep.subr.mxu0 %v218
    %405 = vmatpush1.msra.mxu0 %v217
    %406 = vmatprep.subr.mxu0 %v214
    %407 = vmatpush1.msra.mxu0 %v213
    %408 = vmatprep.subr.mxu0 %v210
    %409 = vmatpush1.msra.mxu0 %v209
    %410 = vmatprep.subr.mxu0 %v206
    %411 = vmatpush1.msra.mxu0 %v205
    %412 = vmatprep.subr.mxu0 %v202
    %413 = vmatpush1.msra.mxu0 %v201
    %414 = vmatprep.subr.mxu0 %v198
    %415 = vmatpush1.msra.mxu0 %v197
    %416 = vmatprep.subr.mxu0 %v194
    %417 = vmatpush1.msra.mxu0 %v193
    %418 = vmatprep.subr.mxu0 %v190
    %419 = vmatpush1.msra.mxu0 %v189
    %420 = vmatprep.subr.mxu0 %v314
    %421 = vmatpush2.msra.mxu0 %v313
    %422 = vmatprep.subr.mxu0 %v310
    %423 = vmatpush2.msra.mxu0 %v309
    %424 = vmatprep.subr.mxu0 %v306
    %425 = vmatpush2.msra.mxu0 %v305
    %426 = vmatprep.subr.mxu0 %v302
    %427 = vmatpush2.msra.mxu0 %v301
    %428 = vmatprep.subr.mxu0 %v298
    %429 = vmatpush2.msra.mxu0 %v297
    %430 = vmatprep.subr.mxu0 %v294
    %431 = vmatpush2.msra.mxu0 %v293
    %432 = vmatprep.subr.mxu0 %v290
    %433 = vmatpush2.msra.mxu0 %v289
    %434 = vmatprep.subr.mxu0 %v286
    %435 = vmatpush2.msra.mxu0 %v285
    %436 = vmatprep.subr.mxu0 %v282
    %437 = vmatpush2.msra.mxu0 %v281
    %438 = vmatprep.subr.mxu0 %v278
    %439 = vmatpush2.msra.mxu0 %v277
    %440 = vmatprep.subr.mxu0 %v274
    %441 = vmatpush2.msra.mxu0 %v273
    %442 = vmatprep.subr.mxu0 %v270
    %443 = vmatpush2.msra.mxu0 %v269
    %444 = vmatprep.subr.mxu0 %v266
    %445 = vmatpush2.msra.mxu0 %v265
    %446 = vmatprep.subr.mxu0 %v262
    %447 = vmatpush2.msra.mxu0 %v261
    %448 = vmatprep.subr.mxu0 %v258
    %449 = vmatpush2.msra.mxu0 %v257
    %450 = vmatprep.subr.mxu0 %v254
    %451 = vmatpush2.msra.mxu0 %v253
    %452 = vmatprep.mubr.f32.mxu0 %v60
    %453 = vmatmul.mubr.f32.gmra.mxu0 %v59
    %v454 = vpop.f32.mrf.mxu0
    %v455 = vadd.f32 %v384, %v454
    %v456 = vpop.f32.mrf.mxu0
    %v457 = vadd.f32 %v386, %v456
    %458 = vdwg.mxu0
    %459 = vmatprep.subr.mxu0 %v124
    %460 = vmatpush1.msra.mxu0 %v123
    %461 = vmatprep.subr.mxu0 %v120
    %462 = vmatpush1.msra.mxu0 %v119
    %463 = vmatprep.subr.mxu0 %v116
    %464 = vmatpush1.msra.mxu0 %v115
    %465 = vmatprep.subr.mxu0 %v112
    %466 = vmatpush1.msra.mxu0 %v111
    %467 = vmatprep.subr.mxu0 %v108
    %468 = vmatpush1.msra.mxu0 %v107
    %469 = vmatprep.subr.mxu0 %v104
    %470 = vmatpush1.msra.mxu0 %v103
    %471 = vmatprep.subr.mxu0 %v100
    %472 = vmatpush1.msra.mxu0 %v99
    %473 = vmatprep.subr.mxu0 %v96
    %474 = vmatpush1.msra.mxu0 %v95
    %475 = vmatprep.subr.mxu0 %v92
    %476 = vmatpush1.msra.mxu0 %v91
    %477 = vmatprep.subr.mxu0 %v88
    %478 = vmatpush1.msra.mxu0 %v87
    %479 = vmatprep.subr.mxu0 %v84
    %480 = vmatpush1.msra.mxu0 %v83
    %481 = vmatprep.subr.mxu0 %v80
    %482 = vmatpush1.msra.mxu0 %v79
    %483 = vmatprep.subr.mxu0 %v76
    %484 = vmatpush1.msra.mxu0 %v75
    %485 = vmatprep.subr.mxu0 %v72
    %486 = vmatpush1.msra.mxu0 %v71
    %487 = vmatprep.subr.mxu0 %v68
    %488 = vmatpush1.msra.mxu0 %v67
    %489 = vmatprep.subr.mxu0 %v64
    %490 = vmatpush1.msra.mxu0 %v63
    %491 = vmatprep.subr.mxu0 %v188
    %492 = vmatpush2.msra.mxu0 %v187
    %493 = vmatprep.subr.mxu0 %v184
    %494 = vmatpush2.msra.mxu0 %v183
    %495 = vmatprep.subr.mxu0 %v180
    %496 = vmatpush2.msra.mxu0 %v179
    %497 = vmatprep.subr.mxu0 %v176
    %498 = vmatpush2.msra.mxu0 %v175
    %499 = vmatprep.subr.mxu0 %v172
    %500 = vmatpush2.msra.mxu0 %v171
    %501 = vmatprep.subr.mxu0 %v168
    %502 = vmatpush2.msra.mxu0 %v167
    %503 = vmatprep.subr.mxu0 %v164
    %504 = vmatpush2.msra.mxu0 %v163
    %505 = vmatprep.subr.mxu0 %v160
    %506 = vmatpush2.msra.mxu0 %v159
    %507 = vmatprep.subr.mxu0 %v156
    %508 = vmatpush2.msra.mxu0 %v155
    %509 = vmatprep.subr.mxu0 %v152
    %510 = vmatpush2.msra.mxu0 %v151
    %511 = vmatprep.subr.mxu0 %v148
    %512 = vmatpush2.msra.mxu0 %v147
    %513 = vmatprep.subr.mxu0 %v144
    %514 = vmatpush2.msra.mxu0 %v143
    %515 = vmatprep.subr.mxu0 %v140
    %516 = vmatpush2.msra.mxu0 %v139
    %517 = vmatprep.subr.mxu0 %v136
    %518 = vmatpush2.msra.mxu0 %v135
    %519 = vmatprep.subr.mxu0 %v132
    %520 = vmatpush2.msra.mxu0 %v131
    %521 = vmatprep.subr.mxu0 %v128
    %522 = vmatpush2.msra.mxu0 %v127
    %523 = vmatprep.mubr.f32.mxu0 %v58
    %524 = vmatmul.mubr.f32.gmra.mxu0 %v57
    %v525 = vpop.f32.mrf.mxu0
    %v526 = vadd.f32 0.0, %v525
    %v527 = vpop.f32.mrf.mxu0
    %v528 = vadd.f32 0.0, %v527
    %529 = vdwg.mxu0
    %530 = vmatprep.subr.mxu0 %v252
    %531 = vmatpush1.msra.mxu0 %v251
    %532 = vmatprep.subr.mxu0 %v248
    %533 = vmatpush1.msra.mxu0 %v247
    %534 = vmatprep.subr.mxu0 %v244
    %535 = vmatpush1.msra.mxu0 %v243
    %536 = vmatprep.subr.mxu0 %v240
    %537 = vmatpush1.msra.mxu0 %v239
    %538 = vmatprep.subr.mxu0 %v236
    %539 = vmatpush1.msra.mxu0 %v235
    %540 = vmatprep.subr.mxu0 %v232
    %541 = vmatpush1.msra.mxu0 %v231
    %542 = vmatprep.subr.mxu0 %v228
    %543 = vmatpush1.msra.mxu0 %v227
    %544 = vmatprep.subr.mxu0 %v224
    %545 = vmatpush1.msra.mxu0 %v223
    %546 = vmatprep.subr.mxu0 %v220
    %547 = vmatpush1.msra.mxu0 %v219
    %548 = vmatprep.subr.mxu0 %v216
    %549 = vmatpush1.msra.mxu0 %v215
    %550 = vmatprep.subr.mxu0 %v212
    %551 = vmatpush1.msra.mxu0 %v211
    %552 = vmatprep.subr.mxu0 %v208
    %553 = vmatpush1.msra.mxu0 %v207
    %554 = vmatprep.subr.mxu0 %v204
    %555 = vmatpush1.msra.mxu0 %v203
    %556 = vmatprep.subr.mxu0 %v200
    %557 = vmatpush1.msra.mxu0 %v199
    %558 = vmatprep.subr.mxu0 %v196
    %559 = vmatpush1.msra.mxu0 %v195
    %560 = vmatprep.subr.mxu0 %v192
    %561 = vmatpush1.msra.mxu0 %v191
    %562 = vmatprep.subr.mxu0 %v316
    %563 = vmatpush2.msra.mxu0 %v315
    %564 = vmatprep.subr.mxu0 %v312
    %565 = vmatpush2.msra.mxu0 %v311
    %566 = vmatprep.subr.mxu0 %v308
    %567 = vmatpush2.msra.mxu0 %v307
    %568 = vmatprep.subr.mxu0 %v304
    %569 = vmatpush2.msra.mxu0 %v303
    %570 = vmatprep.subr.mxu0 %v300
    %571 = vmatpush2.msra.mxu0 %v299
    %572 = vmatprep.subr.mxu0 %v296
    %573 = vmatpush2.msra.mxu0 %v295
    %574 = vmatprep.subr.mxu0 %v292
    %575 = vmatpush2.msra.mxu0 %v291
    %576 = vmatprep.subr.mxu0 %v288
    %577 = vmatpush2.msra.mxu0 %v287
    %578 = vmatprep.subr.mxu0 %v284
    %579 = vmatpush2.msra.mxu0 %v283
    %580 = vmatprep.subr.mxu0 %v280
    %581 = vmatpush2.msra.mxu0 %v279
    %582 = vmatprep.subr.mxu0 %v276
    %583 = vmatpush2.msra.mxu0 %v275
    %584 = vmatprep.subr.mxu0 %v272
    %585 = vmatpush2.msra.mxu0 %v271
    %586 = vmatprep.subr.mxu0 %v268
    %587 = vmatpush2.msra.mxu0 %v267
    %588 = vmatprep.subr.mxu0 %v264
    %589 = vmatpush2.msra.mxu0 %v263
    %590 = vmatprep.subr.mxu0 %v260
    %591 = vmatpush2.msra.mxu0 %v259
    %592 = vmatprep.subr.mxu0 %v256
    %593 = vmatpush2.msra.mxu0 %v255
    %594 = vmatprep.mubr.f32.mxu0 %v60
    %595 = vmatmul.mubr.f32.gmra.mxu0 %v59
    %v596 = vpop.f32.mrf.mxu0
    %v597 = vadd.f32 %v526, %v596
    %v598 = vpop.f32.mrf.mxu0
    %v599 = vadd.f32 %v528, %v598
    %600 = vdwg.mxu0
    %vm601 = vcmp.gt.f32.partialorder %v455, 0.0
    %vm602 = vcmp.gt.f32.partialorder %v457, 0.0
    %vm603 = vcmp.gt.f32.partialorder %v597, 0.0
    %vm604 = vcmp.gt.f32.partialorder %v599, 0.0
    %v605 = vmul.f32 %v455, 0.01
    %v606 = vmul.f32 %v457, 0.01
    %v607 = vmul.f32 %v597, 0.01
    %v608 = vmul.f32 %v599, 0.01
    %v609 = vsel %vm601, %v455, %v605
    %v610 = vsel %vm602, %v457, %v606
    %v611 = vsel %vm603, %v597, %v607
    %v612 = vsel %vm604, %v599, %v608
    %v613 = vld [vmem:[#allocation7] sm:$0xf]
    %v614 = vld [vmem:[#allocation2] sm:$0xff]
    %v616 = vlaneseq
    %v617 = vshrl.u32 %v616, 7
    %v618 = vsub.s32 0, %v617
    %v619 = vrot.slane %v613, %v618
    %v620 = vlaneseq
    %v621 = vshrl.u32 %v620, 7
    %v622 = vsub.s32 1, %v621
    %v623 = vrot.slane %v613, %v622
    %v624 = vlaneseq
    %v625 = vshrl.u32 %v624, 7
    %v626 = vsub.s32 2, %v625
    %v627 = vrot.slane %v613, %v626
    %v628 = vlaneseq
    %v629 = vshrl.u32 %v628, 7
    %v630 = vsub.s32 3, %v629
    %v631 = vrot.slane %v613, %v630
    %v636 = vmul.f32 %v609, %v619
    %v637 = vmul.f32 %v610, %v623
    %v638 = vmul.f32 %v611, %v627
    %v639 = vmul.f32 %v612, %v631
    %v640 = vadd.f32 %v636, %v637
    %v641 = vadd.f32 %v640, %v638
    %v642 = vadd.f32 %v641, %v639
    %643 = vadd.xlane.f32.xlu0 %v642
    %v644 = vpop.xlane.xlu0 %643
    %v645 = vadd.f32 %v614, %v644
    %vm646 = vcmask 7168
    %647 = vst.msk [vmem:[#allocation2] sm:$0xff] %vm646, %v645
    // Predicated region
    $region30: #{tpu_custom_call.1} parent=1 // pred_check
      %p648 = pneg %p51
    $region31: #{tpu_custom_call.1} parent=1 // pred_check_branch
      %650 = sbr.rel (%p648) target = $region33
    $region32: #{tpu_custom_call.1} parent=1 // pred_region
      %v651 = vld [vmem:[#allocation2] sm:$0xff]
      %652 = vst.msk [vmem:[%s3] sm:$0xff] %vm646, %v651
    $region33: #{tpu_custom_call.1} parent=1 // pred_fallthru
      _
    // Predicated region
    $region34: #{tpu_custom_call.1} parent=1 // pred_check
      _
    $region35: #{tpu_custom_call.1} parent=1 // pred_check_branch
      %654 = sbr.rel (0) target = $region37
    $region36: #{tpu_custom_call.1} parent=1 // pred_region
      _
    $region37: #{tpu_custom_call.1} parent=1 // pred_fallthru
      _
    // Predicated region
    $region38: #{tpu_custom_call.1} parent=1 // pred_check
      _
    $region39: #{tpu_custom_call.1} parent=1 // pred_check_branch
      %656 = sbr.rel (0) target = $region41
    $region40: #{tpu_custom_call.1} parent=1 // pred_region
      _
    $region41: #{tpu_custom_call.1} parent=1 // pred_fallthru
      _
    %657 = vsyncpa [#allocation4], 1
    %658 = vsyncpa [#allocation6], 1

</llo_original>
